<compile_context>
chip_gen: v7x
topology: tpu7x:2x2x1
jax: 0.10.0
libtpu: 0.0.40
codegen_flags: <defaults>
</compile_context>

<pallas_src>
import functools
import math

import jax
import jax.numpy as jnp
from jax import lax
from jax.experimental import pallas as pl
from jax.experimental.pallas import tpu as pltpu

LN_EPS = 1e-5  # nn.LayerNorm default eps


# ----------------------------------- kernel -----------------------------------

def _patch_merging_kernel(x_ref, wgt_ref, bias_ref, o_ref, *, ln_eps, use_bf16):
    """One grid step: TR image-row-pairs -> TR*W/2 merged + normalized + projected rows.

    x_ref   : (TR, 2, W/2, 2C)  contiguous view of input rows 2i / 2i+1
    wgt_ref : (4C, 2C)          host-permuted, gamma-folded reduction weight (W'^T)
    bias_ref: (1, 2C)           LN beta folded through the reduction (W @ beta)
    o_ref   : (TR*W/2, 2C)      rows in (b, i, j) order == contiguous output view
    """
    xr = x_ref[...]                               # (TR, 2, W/2, 2C)
    tr, _, w2, c2 = xr.shape
    xe = xr[:, 0]                                 # rows h = 2i   -> channels [x0 | x2]
    xo = xr[:, 1]                                 # rows h = 2i+1 -> channels [x1 | x3]

    # Single lane concat; the "natural" channel order [x0, x2, x1, x3] is matched by
    # the host-side permutation of wgt/bias (LayerNorm is permutation invariant).
    xcat = jnp.concatenate([xe, xo], axis=-1)     # (TR, W/2, 4C)
    xcat = xcat.reshape(tr * w2, 2 * c2)          # (M, 4C) lane-dense tile (leading-dim collapse)

    # LayerNorm over 4C (biased variance, eps inside sqrt); affine folded into wgt/bias.
    mean = jnp.mean(xcat, axis=-1, keepdims=True)
    var = jnp.mean(jnp.square(xcat - mean), axis=-1, keepdims=True)
    xn = (xcat - mean) * lax.rsqrt(var + ln_eps)

    wgt = wgt_ref[...]
    if use_bf16:                                  # bf16-native MXU on v6e/v7x; LN math stays f32
        xn = xn.astype(jnp.bfloat16)
        wgt = wgt.astype(jnp.bfloat16)

    y = jnp.dot(xn, wgt, preferred_element_type=jnp.float32)   # (M, 2C) on the MXU
    o_ref[...] = y + bias_ref[...]


# ---------------------------------- tiling heuristic ----------------------------------

def _choose_rows_per_step(n_rows, w2, bytes_per_row, *, vmem_budget=4 << 20, min_steps=2):
    """Pick how many image-row-pairs each grid step processes.

    Largest divisor of n_rows such that (a) at least `min_steps` grid steps remain
    (so the 'parallel' grid axis can be sharded across v7x's two TensorCores),
    (b) the flattened (tr*w2) sublane count stays 8-aligned (no relayout on the
    in-kernel flatten), and (c) the per-step working set stays inside a
    conservative VMEM budget that is safe on v5e/v6e/v7x alike.
    """
    want_steps = min(min_steps, n_rows)
    best = None
    for tr in range(1, n_rows + 1):
        if n_rows % tr:
            continue
        if (tr * w2) % 8 != 0 and tr != n_rows:
            continue
        if n_rows // tr < want_steps:
            continue
        if tr * bytes_per_row > vmem_budget:
            continue
        best = tr
    if best is None:  # fall back to the smallest legal tile (correctness first)
        for tr in range(1, n_rows + 1):
            if n_rows % tr == 0 and ((tr * w2) % 8 == 0 or tr == n_rows):
                best = tr
                break
    return best


# ----------------------------------- wrapper -----------------------------------

def patch_merging_forward(x, params, *, use_bf16_matmul=False):
    """PatchMerging2D forward: 2x2 space-to-depth -> LayerNorm(4C) -> Linear(4C -> 2C)."""
    B, H, W, C = x.shape
    if H % 2 != 0 or W % 2 != 0:
        # TODO(synk): the reference's SHAPE_FIX crop path for odd H/W is not implemented.
        raise ValueError(f"PatchMerging2D kernel requires even H and W, got {(H, W)}")
    h2, w2 = H // 2, W // 2
    c2, c4 = 2 * C, 4 * C

    # ---- one-time host-side parameter transforms (cache these in real use) ----
    gamma = params["ln_w"].reshape(c4)
    beta = params["ln_b"].reshape(c4)
    w_red = params["red_w"].reshape(c2, c4)          # torch Linear layout: y = x @ W^T
    # kernel's natural channel order is [x0, x2, x1, x3]; permute params to match
    idx = jnp.concatenate([jnp.arange(0 * C, 1 * C), jnp.arange(2 * C, 3 * C),
                           jnp.arange(1 * C, 2 * C), jnp.arange(3 * C, 4 * C)])
    w_nat = w_red[:, idx]
    wgt = (w_nat * gamma[idx][None, :]).T            # (4C, 2C): LN scale folded in
    bias = (w_red @ beta).reshape(1, c2)             # (1, 2C):  LN shift folded in

    # ---- free contiguous views (no XLA transpose, no extra HBM traffic) ----
    n_rows = B * h2
    x_rows = x.reshape(n_rows, 2, w2, c2)            # row r=(b,i): image rows 2i and 2i+1

    bytes_per_row = (2 * W * C                       # input row-pair
                     + 2 * w2 * c4                   # merged + normalized f32 intermediates
                     + w2 * c2) * 4                  # output rows
    tr = _choose_rows_per_step(n_rows, w2, 2 * bytes_per_row)   # x2 ~ double buffering
    n_steps = n_rows // tr
    m = tr * w2

    kernel = functools.partial(_patch_merging_kernel, ln_eps=LN_EPS,
                               use_bf16=use_bf16_matmul)

    out = pl.pallas_call(
        kernel,
        out_shape=jax.ShapeDtypeStruct((n_rows * w2, c2), jnp.float32),
        grid=(n_steps,),
        in_specs=[
            pl.BlockSpec((tr, 2, w2, c2), lambda r: (r, 0, 0, 0)),
            pl.BlockSpec((c4, c2), lambda r: (0, 0)),   # same block every step -> stays resident
            pl.BlockSpec((1, c2), lambda r: (0, 0)),
        ],
        out_specs=pl.BlockSpec((m, c2), lambda r: (r, 0)),
        compiler_params=pltpu.CompilerParams(
            dimension_semantics=("parallel",),          # shard grid steps across TCs (v7x)
            vmem_limit_bytes=32 * 1024 * 1024,
        ),
    )(x_rows, wgt, bias)

    return out.reshape(B, h2, w2, c2)


# ------------------------------- pure-JAX reference -------------------------------

def patch_merging_ref(x, params):
    x0 = x[:, 0::2, 0::2, :]
    x1 = x[:, 1::2, 0::2, :]
    x2 = x[:, 0::2, 1::2, :]
    x3 = x[:, 1::2, 1::2, :]
    xc = jnp.concatenate([x0, x1, x2, x3], axis=-1)          # (B, H/2, W/2, 4C)
    mean = jnp.mean(xc, axis=-1, keepdims=True)
    var = jnp.mean(jnp.square(xc - mean), axis=-1, keepdims=True)
    xn = (xc - mean) / jnp.sqrt(var + LN_EPS)
    xn = xn * params["ln_w"].reshape(-1) + params["ln_b"].reshape(-1)
    return jnp.einsum("bhwc,oc->bhwo", xn, params["red_w"])


# ------------------------------------- main -------------------------------------

if __name__ == "__main__":
    B, H, W, C = 2, 16, 16, 32          # dim=32 -> 4C=128 (full lane width), W/2=8 (8-aligned)
    key = jax.random.PRNGKey(0)
    kx, kw, kg, kb = jax.random.split(key, 4)

    x = jax.random.normal(kx, (B, H, W, C), jnp.float32)
    params = {
        "ln_w": 1.0 + 0.1 * jax.random.normal(kg, (4 * C,), jnp.float32),
        "ln_b": 0.1 * jax.random.normal(kb, (4 * C,), jnp.float32),
        "red_w": jax.random.normal(kw, (2 * C, 4 * C), jnp.float32) / math.sqrt(4 * C),
    }

    out = jax.jit(patch_merging_forward)(x, params)
    jax.block_until_ready(out)

    assert out.shape == (B, H // 2, W // 2, 2 * C) and out.dtype == jnp.float32
    assert bool(jnp.all(jnp.isfinite(out)))

    ref = patch_merging_ref(x, params)
    max_err = float(jnp.max(jnp.abs(out - ref)))
    assert bool(jnp.allclose(out, ref, atol=5e-4, rtol=5e-4)), max_err

    print("KERNEL_OK")
</pallas_src>

<mosaic_0001>
module attributes {stable_mosaic.version = 11 : i64} {
  func.func @_patch_merging_kernel(%arg0: i32, %arg1: memref<8x2x8x64xf32, #tpu.memory_space<vmem>>, %arg2: memref<128x64xf32, #tpu.memory_space<vmem>>, %arg3: memref<1x64xf32, #tpu.memory_space<vmem>>, %arg4: memref<64x64xf32, #tpu.memory_space<vmem>>) attributes {dimension_semantics = [#tpu.dimension_semantics<parallel>], iteration_bounds = array<i64: 2>, scalar_prefetch = 0 : i64, scratch_operands = 0 : i64, tpu.core_type = #tpu.core_type<tc>, window_params = [{transform_indices = @transform_0, window_bounds = array<i64: 8, 2, 8, 64>}, {pipeline_mode = #tpu.pipeline_mode<synchronous>, transform_indices = @transform_1, window_bounds = array<i64: 128, 64>}, {pipeline_mode = #tpu.pipeline_mode<synchronous>, transform_indices = @transform_2, window_bounds = array<i64: 1, 64>}, {transform_indices = @transform_3, window_bounds = array<i64: 64, 64>}]} {
    %c0 = arith.constant 0 : index
    %c0_0 = arith.constant 0 : index
    %c0_1 = arith.constant 0 : index
    %c0_2 = arith.constant 0 : index
    %0 = vector.load %arg1[%c0, %c0_0, %c0_1, %c0_2] : memref<8x2x8x64xf32, #tpu.memory_space<vmem>>, vector<8x2x8x64xf32>
    %1 = vector.extract_strided_slice %0 {offsets = [0, 0, 0, 0], sizes = [8, 1, 8, 64], strides = [1, 1, 1, 1]} : vector<8x2x8x64xf32> to vector<8x1x8x64xf32>
    %2 = vector.shape_cast %1 : vector<8x1x8x64xf32> to vector<8x8x64xf32>
    %3 = vector.extract_strided_slice %0 {offsets = [0, 1, 0, 0], sizes = [8, 1, 8, 64], strides = [1, 1, 1, 1]} : vector<8x2x8x64xf32> to vector<8x1x8x64xf32>
    %4 = vector.shape_cast %3 : vector<8x1x8x64xf32> to vector<8x8x64xf32>
    %5 = tpu.concatenate %2, %4 in 2 : vector<8x8x64xf32>, vector<8x8x64xf32> -> vector<8x8x128xf32>
    %6 = vector.shape_cast %5 : vector<8x8x128xf32> to vector<64x128xf32>
    %cst = arith.constant dense<0.000000e+00> : vector<64xf32>
    %7 = vector.multi_reduction <add>, %6, %cst [1] : vector<64x128xf32> to vector<64xf32>
    %8 = vector.shape_cast %7 : vector<64xf32> to vector<64x1xf32>
    %cst_3 = arith.constant 1.280000e+02 : f32
    %9 = vector.broadcast %cst_3 : f32 to vector<64x1xf32>
    %10 = arith.divf %8, %9 : vector<64x1xf32>
    %11 = vector.broadcast %10 : vector<64x1xf32> to vector<64x128xf32>
    %12 = arith.subf %6, %11 : vector<64x128xf32>
    %13 = arith.mulf %12, %12 : vector<64x128xf32>
    %cst_4 = arith.constant dense<0.000000e+00> : vector<64xf32>
    %14 = vector.multi_reduction <add>, %13, %cst_4 [1] : vector<64x128xf32> to vector<64xf32>
    %15 = vector.shape_cast %14 : vector<64xf32> to vector<64x1xf32>
    %cst_5 = arith.constant 1.280000e+02 : f32
    %16 = vector.broadcast %cst_5 : f32 to vector<64x1xf32>
    %17 = arith.divf %15, %16 : vector<64x1xf32>
    %18 = vector.broadcast %10 : vector<64x1xf32> to vector<64x128xf32>
    %19 = arith.subf %6, %18 : vector<64x128xf32>
    %cst_6 = arith.constant 9.99999974E-6 : f32
    %20 = vector.broadcast %cst_6 : f32 to vector<64x1xf32>
    %21 = arith.addf %17, %20 : vector<64x1xf32>
    %22 = math.rsqrt %21 : vector<64x1xf32>
    %23 = vector.broadcast %22 : vector<64x1xf32> to vector<64x128xf32>
    %24 = arith.mulf %19, %23 : vector<64x128xf32>
    %c0_7 = arith.constant 0 : index
    %c0_8 = arith.constant 0 : index
    %25 = vector.load %arg2[%c0_7, %c0_8] : memref<128x64xf32, #tpu.memory_space<vmem>>, vector<128x64xf32>
    %cst_9 = arith.constant dense<0.000000e+00> : vector<64x64xf32>
    %26 = tpu.matmul %24, %25, %cst_9 {dimension_numbers = #tpu.dot_dimension_numbers<[1], [0], [0], [1], [0, 0, 1, 1], [], []>} : vector<64x128xf32>, vector<128x64xf32>, vector<64x64xf32> -> vector<64x64xf32>
    %c0_10 = arith.constant 0 : index
    %c0_11 = arith.constant 0 : index
    %27 = vector.load %arg3[%c0_10, %c0_11] : memref<1x64xf32, #tpu.memory_space<vmem>>, vector<1x64xf32>
    %28 = vector.broadcast %27 : vector<1x64xf32> to vector<64x64xf32>
    %29 = arith.addf %26, %28 : vector<64x64xf32>
    %c0_12 = arith.constant 0 : index
    %c0_13 = arith.constant 0 : index
    %30 = vector.load %arg4[%c0_12, %c0_13] : memref<64x64xf32, #tpu.memory_space<vmem>>, vector<64x64xf32>
    tpu.vector_store %arg4[%c0_12, %c0_13], %29 {strides = array<i32>} : memref<64x64xf32, #tpu.memory_space<vmem>>, vector<64x64xf32>,
    return
  }
  func.func @transform_0(%arg0: i32) -> (i32, i32, i32, i32) {
    %c0_i32 = arith.constant 0 : i32
    %c0_i32_0 = arith.constant 0 : i32
    %c0_i32_1 = arith.constant 0 : i32
    %c0_i32_2 = arith.constant 0 : i32
    return %arg0, %c0_i32, %c0_i32_0, %c0_i32_1 : i32, i32, i32, i32
  }
  func.func @transform_1(%arg0: i32) -> (i32, i32) {
    %c0_i32 = arith.constant 0 : i32
    %c0_i32_0 = arith.constant 0 : i32
    %c0_i32_1 = arith.constant 0 : i32
    return %c0_i32, %c0_i32_0 : i32, i32
  }
  func.func @transform_2(%arg0: i32) -> (i32, i32) {
    %c0_i32 = arith.constant 0 : i32
    %c0_i32_0 = arith.constant 0 : i32
    %c0_i32_1 = arith.constant 0 : i32
    return %c0_i32, %c0_i32_0 : i32, i32
  }
  func.func @transform_3(%arg0: i32) -> (i32, i32) {
    %c0_i32 = arith.constant 0 : i32
    %c0_i32_0 = arith.constant 0 : i32
    return %arg0, %c0_i32 : i32, i32
  }
}

</mosaic_0001>

<llo_original>
// kernel: patch_merging_forward.1
$region0: #{patch_merging_forward.1}
  #allocation0 [shape = 'u32[]', space=smem, size = 0x4, offset = 0x4, fixed_abs, tag = 'smem constant byte address 0x4 - core index']
  #allocation1 [shape = 'u32[144,128]{1,0:T(1,128)}', space=vmem, size = 0x12000, scoped, tag = 'internal scratch']
  %s0 = inlined_call_operand.vmem [shape: f32[16,2,8,64], index: 0, kind: input, shape index: {}]
  %s1 = inlined_call_operand.vmem [shape: f32[128,64], index: 1, kind: input, shape index: {}]
  %s2 = inlined_call_operand.vmem [shape: f32[1,64], index: 2, kind: input, shape index: {}]
  %s3 = inlined_call_operand.hbm [shape: f32[128,64], index: 3, kind: output, shape index: {}]
  %s4 = sld [smem:[#allocation0]]
  $region45: #{patch_merging_forward.1} parent=0
    _
  %s6 = ssub.s32 1, %s4
  %s7 = scalar_select 0, %s6, %s4
  $region1: #{patch_merging_forward.1} parent=0
    #allocation2 [shape = 'u8[65536]{0}', space=vmem, size = 0x10000, scoped, tag = 'output window, operand 0']
    #allocation3 [shape = 's32[2]{0}', space=sflag, size = 0x8, scoped, tag = 'scoped memory for patch_merging_forward.1']
    %8 = vsyncpa [#allocation3], 0
    %s9 = scalar_lea.sflag [#allocation3], 1
    %10 = vsyncpa %s9, 0
    loop: start=0, step=1, limit=4
    $region2: #{patch_merging_forward.1} parent=1 // loop_pre_header
      _
    $region3: #{patch_merging_forward.1} parent=1 // loop_header
      %s12 = sphi 0, %s16
      %p13 = scmp.ge.s32.totalorder %s12, 4
      %s22 = sphi 0, %s24
      %s25 = sphi 0, %s22
      %s26 = sphi 0, %s25
      %s42 = sphi 0, %s26
      %s46 = sphi 0, %s46
      %s48 = sphi 0, %s46
      %s49 = sphi 0, %s48
      %s63 = sphi 0, %s49
      %s67 = sphi 0, %s67
      %s69 = sphi 0, %s67
      %s70 = sphi 0, %s69
      %s84 = sphi 0, %s70
      %s90 = sphi 0, %s92
      %s93 = sphi 0, %s90
      %s94 = sphi 0, %s93
      %s110 = sphi 0, %s94
    $region4: #{patch_merging_forward.1} parent=1 // loop_header_branch
      %15 = sbr.rel (%p13) target = $region8
    $region5: #{patch_merging_forward.1} parent=1 // loop_body
      %s17 = ssub.s32 %s12, 1
      %s18 = ssub.s32 %s12, 2
      %s19 = sadd.s32 %s12, 1
      %s20 = ssub.s32 %s12, %s19
      %p21 = scmp.eq.s32.totalorder %s20, 0
      %s23 = sadd.s32 %s22, 1
      %s24 = scalar_select %p21, %s22, %s23
      %p27 = pneg %p21
      %p28 = scmp.eq.s32.totalorder %s12, 1
      %p29 = por %p27, %p28
      %p30 = scmp.ne.s32.totalorder %s22, %s25
      %p31 = scmp.eq.s32.totalorder %s12, 0
      %p32 = por %p30, %p31
      %p33 = scmp.ne.s32.totalorder %s22, %s25
      %p34 = scmp.eq.s32.totalorder %s17, 1
      %p35 = por %p33, %p34
      %p36 = scmp.ne.s32.totalorder %s25, %s26
      %p37 = scmp.eq.s32.totalorder %s17, 0
      %p38 = por %p36, %p37
      %p39 = scmp.ne.s32.totalorder %s25, %s26
      %p40 = scmp.eq.s32.totalorder %s18, 1
      %p41 = por %p39, %p40
      %p43 = scmp.ne.s32.totalorder %s26, %s42
      %p44 = scmp.eq.s32.totalorder %s18, 0
      %p45 = por %p43, %p44
      %s47 = sadd.s32 %s46, 1
      %p50 = scmp.eq.s32.totalorder %s12, 1
      %p51 = scmp.ne.s32.totalorder %s46, %s48
      %p52 = scmp.eq.s32.totalorder %s12, 0
      %p53 = por %p51, %p52
      %p54 = scmp.ne.s32.totalorder %s46, %s48
      %p55 = scmp.eq.s32.totalorder %s17, 1
      %p56 = por %p54, %p55
      %p57 = scmp.ne.s32.totalorder %s48, %s49
      %p58 = scmp.eq.s32.totalorder %s17, 0
      %p59 = por %p57, %p58
      %p60 = scmp.ne.s32.totalorder %s48, %s49
      %p61 = scmp.eq.s32.totalorder %s18, 1
      %p62 = por %p60, %p61
      %p64 = scmp.ne.s32.totalorder %s49, %s63
      %p65 = scmp.eq.s32.totalorder %s18, 0
      %p66 = por %p64, %p65
      %s68 = sadd.s32 %s67, 1
      %p71 = scmp.eq.s32.totalorder %s12, 1
      %p72 = scmp.ne.s32.totalorder %s67, %s69
      %p73 = scmp.eq.s32.totalorder %s12, 0
      %p74 = por %p72, %p73
      %p75 = scmp.ne.s32.totalorder %s67, %s69
      %p76 = scmp.eq.s32.totalorder %s17, 1
      %p77 = por %p75, %p76
      %p78 = scmp.ne.s32.totalorder %s69, %s70
      %p79 = scmp.eq.s32.totalorder %s17, 0
      %p80 = por %p78, %p79
      %p81 = scmp.ne.s32.totalorder %s69, %s70
      %p82 = scmp.eq.s32.totalorder %s18, 1
      %p83 = por %p81, %p82
      %p85 = scmp.ne.s32.totalorder %s70, %s84
      %p86 = scmp.eq.s32.totalorder %s18, 0
      %p87 = por %p85, %p86
      %s88 = ssub.s32 %s12, %s19
      %p89 = scmp.eq.s32.totalorder %s88, 0
      %s91 = sadd.s32 %s90, 1
      %s92 = scalar_select %p89, %s90, %s91
      %p95 = pneg %p89
      %p96 = scmp.eq.s32.totalorder %s12, 1
      %p97 = por %p95, %p96
      %p98 = scmp.ne.s32.totalorder %s90, %s93
      %p99 = scmp.eq.s32.totalorder %s12, 0
      %p100 = por %p98, %p99
      %p101 = scmp.ne.s32.totalorder %s90, %s93
      %p102 = scmp.eq.s32.totalorder %s17, 1
      %p103 = por %p101, %p102
      %p104 = scmp.ne.s32.totalorder %s93, %s94
      %p105 = scmp.eq.s32.totalorder %s17, 0
      %p106 = por %p104, %p105
      %p107 = scmp.ne.s32.totalorder %s93, %s94
      %p108 = scmp.eq.s32.totalorder %s18, 1
      %p109 = por %p107, %p108
      %p111 = scmp.ne.s32.totalorder %s94, %s110
      %p112 = scmp.eq.s32.totalorder %s18, 0
      %p113 = por %p111, %p112
      %p114 = scmp.le.s32.totalorder 1, %s12
      %p115 = scmp.lt.s32.totalorder %s12, 3
      %p116 = pnand %p114, %p115
      %p117 = pneg %p116
      // Predicated region
      $region9: #{patch_merging_forward.1} parent=5 // pred_check
        _
      $region10: #{patch_merging_forward.1} parent=5 // pred_check_branch
        %119 = sbr.rel (%p116) target = $region12
      $region11: #{patch_merging_forward.1} parent=5 // pred_region
        %s120 = ssub.s32 %s12, 1
        // Predicated region
        $region13: #{patch_merging_forward.1} parent=11 // pred_check
          %p121 = pneg %p59
        $region14: #{patch_merging_forward.1} parent=11 // pred_check_branch
          %123 = sbr.rel (%p121) target = $region16
        $region15: #{patch_merging_forward.1} parent=11 // pred_region
          _
        $region16: #{patch_merging_forward.1} parent=11 // pred_fallthru
          _
        // Predicated region
        $region17: #{patch_merging_forward.1} parent=11 // pred_check
          %p124 = pneg %p80
        $region18: #{patch_merging_forward.1} parent=11 // pred_check_branch
          %126 = sbr.rel (%p124) target = $region20
        $region19: #{patch_merging_forward.1} parent=11 // pred_region
          _
        $region20: #{patch_merging_forward.1} parent=11 // pred_fallthru
          _
      $region12: #{patch_merging_forward.1} parent=5 // pred_fallthru
        _
      %p127 = scmp.lt.s32.totalorder %s12, 2
      // Predicated region
      $region21: #{patch_merging_forward.1} parent=5 // pred_check
        %p128 = pneg %p127
      $region22: #{patch_merging_forward.1} parent=5 // pred_check_branch
        %130 = sbr.rel (%p128) target = $region24
      $region23: #{patch_merging_forward.1} parent=5 // pred_region
        // Predicated region
        $region25: #{patch_merging_forward.1} parent=23 // pred_check
          %p131 = pneg %p32
        $region26: #{patch_merging_forward.1} parent=23 // pred_check_branch
          %133 = sbr.rel (%p131) target = $region28
        $region27: #{patch_merging_forward.1} parent=23 // pred_region
          %s134 = smul.u32 8, %s12
          %p135 = scmp.lt.s32.totalorder %s134, 15
          %s136 = scalar_select %p135, %s134, 15
          %s137 = smul.addr %s136, 2
          %s138 = smul.addr %s137, 8
          %s139 = scalar_lea.vmem %s0, %s138
          %s140 = smul.u32 8, %s12
        $region28: #{patch_merging_forward.1} parent=23 // pred_fallthru
          _
      $region24: #{patch_merging_forward.1} parent=5 // pred_fallthru
        _
      %p141 = scmp.le.s32.totalorder 1, %s12
      %p142 = scmp.lt.s32.totalorder %s12, 3
      %p143 = pnand %p141, %p142
      %p144 = pneg %p143
      // Predicated region
      $region29: #{patch_merging_forward.1} parent=5 // pred_check
        _
      $region30: #{patch_merging_forward.1} parent=5 // pred_check_branch
        %146 = sbr.rel (%p143) target = $region32
      $region31: #{patch_merging_forward.1} parent=5 // pred_region
        %s147 = ssub.s32 %s12, 1
        %s148 = smul.u32 8, %s17
        %p149 = scmp.lt.s32.totalorder %s148, 15
        %s150 = scalar_select %p149, %s148, 15
        %s151 = smul.addr %s150, 2
        %s152 = smul.addr %s151, 8
        %s153 = scalar_lea.vmem %s0, %s152
        %p154 = pneg %p38
        %p155 = pneg %p35
        %p156 = pneg %p59
        %p157 = pneg %p56
        %p158 = pneg %p80
        %p159 = pneg %p77
        %p160 = pneg %p106
        %p161 = pneg %p103
        %s162 = sand.u32 %s93, 1
        %s163 = scalar_lea.sflag [#allocation3], %s162
        %s164 = sand.u32 %s93, 1
        %s165 = smul.addr %s164, 64
        %s166 = scalar_lea.vmem [#allocation2], %s165
        %s167 = smul.u32 8, %s17
        %p168 = scmp.lt.s32.totalorder %s167, 15
        %s169 = scalar_select %p168, %s167, 15
        %s170 = smul.addr %s169, 2
        %s171 = smul.addr %s170, 8
        %s172 = scalar_lea.vmem %s0, %s171
        %s173 = smul.u32 8, %s17
        %s174 = smul.u32 8, %s17
        %v175 = vld [vmem:[%s172] sm:$0xff]
        %v176 = vld [vmem:[%s172 + $0x8] sm:$0xff]
        %v177 = vld [vmem:[%s172 + $0x10] sm:$0xff]
        %v178 = vld [vmem:[%s172 + $0x18] sm:$0xff]
        %v179 = vld [vmem:[%s172 + $0x20] sm:$0xff]
        %v180 = vld [vmem:[%s172 + $0x28] sm:$0xff]
        %v181 = vld [vmem:[%s172 + $0x30] sm:$0xff]
        %v182 = vld [vmem:[%s172 + $0x38] sm:$0xff]
        %v183 = vld [vmem:[%s172 + $0x40] sm:$0xff]
        %v184 = vld [vmem:[%s172 + $0x48] sm:$0xff]
        %v185 = vld [vmem:[%s172 + $0x50] sm:$0xff]
        %v186 = vld [vmem:[%s172 + $0x58] sm:$0xff]
        %v187 = vld [vmem:[%s172 + $0x60] sm:$0xff]
        %v188 = vld [vmem:[%s172 + $0x68] sm:$0xff]
        %v189 = vld [vmem:[%s172 + $0x70] sm:$0xff]
        %v190 = vld [vmem:[%s172 + $0x78] sm:$0xff]
        %199 = vrot.lane.b32.xlu0 %v176, 64
        %v200 = vpop.permute.xlu0 %199
        %201 = vrot.lane.b32.xlu0 %v178, 64
        %v202 = vpop.permute.xlu0 %201
        %203 = vrot.lane.b32.xlu0 %v180, 64
        %v204 = vpop.permute.xlu0 %203
        %205 = vrot.lane.b32.xlu0 %v182, 64
        %v206 = vpop.permute.xlu0 %205
        %207 = vrot.lane.b32.xlu0 %v184, 64
        %v208 = vpop.permute.xlu0 %207
        %209 = vrot.lane.b32.xlu0 %v186, 64
        %v210 = vpop.permute.xlu0 %209
        %211 = vrot.lane.b32.xlu0 %v188, 64
        %v212 = vpop.permute.xlu0 %211
        %213 = vrot.lane.b32.xlu0 %v190, 64
        %v214 = vpop.permute.xlu0 %213
        %vm223 = vcmask 523264
        %v224 = vsel %vm223, %v175, %v200
        %v225 = vsel %vm223, %v177, %v202
        %v226 = vsel %vm223, %v179, %v204
        %v227 = vsel %vm223, %v181, %v206
        %v228 = vsel %vm223, %v183, %v208
        %v229 = vsel %vm223, %v185, %v210
        %v230 = vsel %vm223, %v187, %v212
        %v231 = vsel %vm223, %v189, %v214
        %232 = vadd.xlane.f32.xlu0 %v224
        %v233 = vpop.xlane.xlu0 %232
        %234 = vadd.xlane.f32.xlu0 %v225
        %v235 = vpop.xlane.xlu0 %234
        %236 = vadd.xlane.f32.xlu0 %v226
        %v237 = vpop.xlane.xlu0 %236
        %238 = vadd.xlane.f32.xlu0 %v227
        %v239 = vpop.xlane.xlu0 %238
        %240 = vadd.xlane.f32.xlu0 %v228
        %v241 = vpop.xlane.xlu0 %240
        %242 = vadd.xlane.f32.xlu0 %v229
        %v243 = vpop.xlane.xlu0 %242
        %244 = vadd.xlane.f32.xlu0 %v230
        %v245 = vpop.xlane.xlu0 %244
        %246 = vadd.xlane.f32.xlu0 %v231
        %v247 = vpop.xlane.xlu0 %246
        %v248 = vrcp.pop 128.0
        %v249 = vmul.f32 %v233, %v248
        %v250 = vmul.f32 %v235, %v248
        %v251 = vmul.f32 %v237, %v248
        %v252 = vmul.f32 %v239, %v248
        %v253 = vmul.f32 %v241, %v248
        %v254 = vmul.f32 %v243, %v248
        %v255 = vmul.f32 %v245, %v248
        %v256 = vmul.f32 %v247, %v248
        %v257 = vsub.f32 %v224, %v249
        %v258 = vsub.f32 %v225, %v250
        %v259 = vsub.f32 %v226, %v251
        %v260 = vsub.f32 %v227, %v252
        %v261 = vsub.f32 %v228, %v253
        %v262 = vsub.f32 %v229, %v254
        %v263 = vsub.f32 %v230, %v255
        %v264 = vsub.f32 %v231, %v256
        %v265 = vmul.f32 %v257, %v257
        %v266 = vmul.f32 %v258, %v258
        %v267 = vmul.f32 %v259, %v259
        %v268 = vmul.f32 %v260, %v260
        %v269 = vmul.f32 %v261, %v261
        %v270 = vmul.f32 %v262, %v262
        %v271 = vmul.f32 %v263, %v263
        %v272 = vmul.f32 %v264, %v264
        %273 = vadd.xlane.f32.xlu0 %v265
        %v274 = vpop.xlane.xlu0 %273
        %275 = vadd.xlane.f32.xlu0 %v266
        %v276 = vpop.xlane.xlu0 %275
        %277 = vadd.xlane.f32.xlu0 %v267
        %v278 = vpop.xlane.xlu0 %277
        %279 = vadd.xlane.f32.xlu0 %v268
        %v280 = vpop.xlane.xlu0 %279
        %281 = vadd.xlane.f32.xlu0 %v269
        %v282 = vpop.xlane.xlu0 %281
        %283 = vadd.xlane.f32.xlu0 %v270
        %v284 = vpop.xlane.xlu0 %283
        %285 = vadd.xlane.f32.xlu0 %v271
        %v286 = vpop.xlane.xlu0 %285
        %287 = vadd.xlane.f32.xlu0 %v272
        %v288 = vpop.xlane.xlu0 %287
        %v289 = vmul.f32 %v274, %v248
        %v290 = vmul.f32 %v276, %v248
        %v291 = vmul.f32 %v278, %v248
        %v292 = vmul.f32 %v280, %v248
        %v293 = vmul.f32 %v282, %v248
        %v294 = vmul.f32 %v284, %v248
        %v295 = vmul.f32 %v286, %v248
        %v296 = vmul.f32 %v288, %v248
        %v297 = vadd.f32 %v289, 1e-05
        %v298 = vadd.f32 %v290, 1e-05
        %v299 = vadd.f32 %v291, 1e-05
        %v300 = vadd.f32 %v292, 1e-05
        %v301 = vadd.f32 %v293, 1e-05
        %v302 = vadd.f32 %v294, 1e-05
        %v303 = vadd.f32 %v295, 1e-05
        %v304 = vadd.f32 %v296, 1e-05
        %v305 = vrsqrt.pop %v297
        %v306 = vrsqrt.pop %v298
        %v307 = vrsqrt.pop %v299
        %v308 = vrsqrt.pop %v300
        %v309 = vrsqrt.pop %v301
        %v310 = vrsqrt.pop %v302
        %v311 = vrsqrt.pop %v303
        %v312 = vrsqrt.pop %v304
        %v313 = vmul.f32 %v257, %v305
        %v314 = vmul.f32 %v258, %v306
        %v315 = vmul.f32 %v259, %v307
        %v316 = vmul.f32 %v260, %v308
        %v317 = vmul.f32 %v261, %v309
        %v318 = vmul.f32 %v262, %v310
        %v319 = vmul.f32 %v263, %v311
        %v320 = vmul.f32 %v264, %v312
        %v321 = vld [vmem:[%s1] sm:$0xff]
        %v322 = vld [vmem:[%s1 + $0x8] sm:$0xff]
        %v323 = vld [vmem:[%s1 + $0x10] sm:$0xff]
        %v324 = vld [vmem:[%s1 + $0x18] sm:$0xff]
        %v325 = vld [vmem:[%s1 + $0x20] sm:$0xff]
        %v326 = vld [vmem:[%s1 + $0x28] sm:$0xff]
        %v327 = vld [vmem:[%s1 + $0x30] sm:$0xff]
        %v328 = vld [vmem:[%s1 + $0x38] sm:$0xff]
        %v329 = vld [vmem:[%s1 + $0x40] sm:$0xff]
        %v330 = vld [vmem:[%s1 + $0x48] sm:$0xff]
        %v331 = vld [vmem:[%s1 + $0x50] sm:$0xff]
        %v332 = vld [vmem:[%s1 + $0x58] sm:$0xff]
        %v333 = vld [vmem:[%s1 + $0x60] sm:$0xff]
        %v334 = vld [vmem:[%s1 + $0x68] sm:$0xff]
        %v335 = vld [vmem:[%s1 + $0x70] sm:$0xff]
        %v336 = vld [vmem:[%s1 + $0x78] sm:$0xff]
        %v337 = vld [vmem:[%s2] sm:$0x1]
        %v339 = vlaneseq
        %v340 = vshrl.u32 %v339, 7
        %v341 = vsub.s32 0, %v340
        %v342 = vrot.slane %v337, %v341
        %344 = vmatprep.subr.mxu0 0.0
        %345 = vmatpush1.msra.mxu0 %v321
        %346 = vmatprep.subr.mxu0 0.0
        %347 = vmatpush1.msra.mxu0 %v322
        %348 = vmatprep.subr.mxu0 0.0
        %349 = vmatpush1.msra.mxu0 %v323
        %350 = vmatprep.subr.mxu0 0.0
        %351 = vmatpush1.msra.mxu0 %v324
        %352 = vmatprep.subr.mxu0 0.0
        %353 = vmatpush1.msra.mxu0 %v325
        %354 = vmatprep.subr.mxu0 0.0
        %355 = vmatpush1.msra.mxu0 %v326
        %356 = vmatprep.subr.mxu0 0.0
        %357 = vmatpush1.msra.mxu0 %v327
        %358 = vmatprep.subr.mxu0 0.0
        %359 = vmatpush1.msra.mxu0 %v328
        %360 = vmatprep.subr.mxu0 0.0
        %361 = vmatpush1.msra.mxu0 %v329
        %362 = vmatprep.subr.mxu0 0.0
        %363 = vmatpush1.msra.mxu0 %v330
        %364 = vmatprep.subr.mxu0 0.0
        %365 = vmatpush1.msra.mxu0 %v331
        %366 = vmatprep.subr.mxu0 0.0
        %367 = vmatpush1.msra.mxu0 %v332
        %368 = vmatprep.subr.mxu0 0.0
        %369 = vmatpush1.msra.mxu0 %v333
        %370 = vmatprep.subr.mxu0 0.0
        %371 = vmatpush1.msra.mxu0 %v334
        %372 = vmatprep.subr.mxu0 0.0
        %373 = vmatpush1.msra.mxu0 %v335
        %374 = vmatprep.subr.mxu0 0.0
        %375 = vmatpush1.msra.mxu0 %v336
        %376 = vmatprep.subr.mxu0 0.0
        %377 = vmatpush1.msra.mxu0 0.0
        %378 = vmatprep.subr.mxu0 0.0
        %379 = vmatpush1.msra.mxu0 0.0
        %380 = vmatprep.subr.mxu0 0.0
        %381 = vmatpush1.msra.mxu0 0.0
        %382 = vmatprep.subr.mxu0 0.0
        %383 = vmatpush1.msra.mxu0 0.0
        %384 = vmatprep.subr.mxu0 0.0
        %385 = vmatpush1.msra.mxu0 0.0
        %386 = vmatprep.subr.mxu0 0.0
        %387 = vmatpush1.msra.mxu0 0.0
        %388 = vmatprep.subr.mxu0 0.0
        %389 = vmatpush1.msra.mxu0 0.0
        %390 = vmatprep.subr.mxu0 0.0
        %391 = vmatpush1.msra.mxu0 0.0
        %392 = vmatprep.subr.mxu0 0.0
        %393 = vmatpush1.msra.mxu0 0.0
        %394 = vmatprep.subr.mxu0 0.0
        %395 = vmatpush1.msra.mxu0 0.0
        %396 = vmatprep.subr.mxu0 0.0
        %397 = vmatpush1.msra.mxu0 0.0
        %398 = vmatprep.subr.mxu0 0.0
        %399 = vmatpush1.msra.mxu0 0.0
        %400 = vmatprep.subr.mxu0 0.0
        %401 = vmatpush1.msra.mxu0 0.0
        %402 = vmatprep.subr.mxu0 0.0
        %403 = vmatpush1.msra.mxu0 0.0
        %404 = vmatprep.subr.mxu0 0.0
        %405 = vmatpush1.msra.mxu0 0.0
        %406 = vmatprep.subr.mxu0 0.0
        %407 = vmatpush1.msra.mxu0 0.0
        %408 = vmatprep.mubr.f32.mxu0 0.0
        %409 = vmatmul.mubr.f32.gmra.mrb[0].mxu0 %v313
        %v410 = vpop.f32.mrb[0].mxu0
        %v411 = vadd.f32 %v342, %v410
        %v412 = vpop.f32.mrb[0].mxu0
        %413 = vmatprep.mubr.f32.mxu0 0.0
        %414 = vmatmul.mubr.f32.gmra.mrb[0].mxu0 %v314
        %v415 = vpop.f32.mrb[0].mxu0
        %v416 = vadd.f32 %v342, %v415
        %v417 = vpop.f32.mrb[0].mxu0
        %418 = vmatprep.mubr.f32.mxu0 0.0
        %419 = vmatmul.mubr.f32.gmra.mrb[0].mxu0 %v315
        %v420 = vpop.f32.mrb[0].mxu0
        %v421 = vadd.f32 %v342, %v420
        %v422 = vpop.f32.mrb[0].mxu0
        %423 = vmatprep.mubr.f32.mxu0 0.0
        %424 = vmatmul.mubr.f32.gmra.mrb[0].mxu0 %v316
        %v425 = vpop.f32.mrb[0].mxu0
        %v426 = vadd.f32 %v342, %v425
        %v427 = vpop.f32.mrb[0].mxu0
        %428 = vmatprep.mubr.f32.mxu0 0.0
        %429 = vmatmul.mubr.f32.gmra.mrb[0].mxu0 %v317
        %v430 = vpop.f32.mrb[0].mxu0
        %v431 = vadd.f32 %v342, %v430
        %v432 = vpop.f32.mrb[0].mxu0
        %433 = vmatprep.mubr.f32.mxu0 0.0
        %434 = vmatmul.mubr.f32.gmra.mrb[0].mxu0 %v318
        %v435 = vpop.f32.mrb[0].mxu0
        %v436 = vadd.f32 %v342, %v435
        %v437 = vpop.f32.mrb[0].mxu0
        %438 = vmatprep.mubr.f32.mxu0 0.0
        %439 = vmatmul.mubr.f32.gmra.mrb[0].mxu0 %v319
        %v440 = vpop.f32.mrb[0].mxu0
        %v441 = vadd.f32 %v342, %v440
        %v442 = vpop.f32.mrb[0].mxu0
        %443 = vmatprep.mubr.f32.mxu0 0.0
        %444 = vmatmul.mubr.f32.gmra.mrb[0].mxu0 %v320
        %v445 = vpop.f32.mrb[0].mxu0
        %v446 = vadd.f32 %v342, %v445
        %v447 = vpop.f32.mrb[0].mxu0
        %448 = vdwg.mxu0
        %449 = vst.msk [vmem:[%s166] sm:$0xff] %vm223, %v411
        %450 = vst.msk [vmem:[%s166 + $0x8] sm:$0xff] %vm223, %v416
        %451 = vst.msk [vmem:[%s166 + $0x10] sm:$0xff] %vm223, %v421
        %452 = vst.msk [vmem:[%s166 + $0x18] sm:$0xff] %vm223, %v426
        %453 = vst.msk [vmem:[%s166 + $0x20] sm:$0xff] %vm223, %v431
        %454 = vst.msk [vmem:[%s166 + $0x28] sm:$0xff] %vm223, %v436
        %455 = vst.msk [vmem:[%s166 + $0x30] sm:$0xff] %vm223, %v441
        %456 = vst.msk [vmem:[%s166 + $0x38] sm:$0xff] %vm223, %v446
        %s457 = sand.u32 %s93, 1
        %s458 = scalar_lea.sflag [#allocation3], %s457
        %s459 = sand.u32 %s93, 1
        %s460 = smul.addr %s459, 64
        %s461 = scalar_lea.vmem [#allocation2], %s460
        // Predicated region
        $region33: #{patch_merging_forward.1} parent=31 // pred_check
          %p462 = pneg %p103
        $region34: #{patch_merging_forward.1} parent=31 // pred_check_branch
          %464 = sbr.rel (%p462) target = $region36
        $region35: #{patch_merging_forward.1} parent=31 // pred_region
          %s465 = smul.u32 8, %s17
          %s467 = ssub.s32 1024, 1024
          %468 = vsyncadd %s458, %s467
          %s469 = smul.addr %s465, 128
          %s470 = scalar_lea.hbm %s3, %s469
          %s471 = sshll.u32 %s461, 4
          %s472 = int_to_ptr.vmem [resolvable:$true] %s471
          %477 = dma.vmem_to_hbm [thread:$0]  %s472, 1024, %s470, %s458, 128, 128, 8
        $region36: #{patch_merging_forward.1} parent=31 // pred_fallthru
          _
      $region32: #{patch_merging_forward.1} parent=5 // pred_fallthru
        _
      %p478 = scmp.le.s32.totalorder 2, %s12
      // Predicated region
      $region37: #{patch_merging_forward.1} parent=5 // pred_check
        %p479 = pneg %p478
      $region38: #{patch_merging_forward.1} parent=5 // pred_check_branch
        %481 = sbr.rel (%p479) target = $region40
      $region39: #{patch_merging_forward.1} parent=5 // pred_region
        %s482 = ssub.s32 %s12, 2
        // Predicated region
        $region41: #{patch_merging_forward.1} parent=39 // pred_check
          %p483 = pneg %p109
        $region42: #{patch_merging_forward.1} parent=39 // pred_check_branch
          %485 = sbr.rel (%p483) target = $region44
        $region43: #{patch_merging_forward.1} parent=39 // pred_region
          %s486 = sand.u32 %s94, 1
          %s487 = scalar_lea.sflag [#allocation3], %s486
          %s488 = sand.u32 %s94, 1
          %s489 = smul.addr %s488, 64
          %s490 = scalar_lea.vmem [#allocation2], %s489
          %491 = dma.done %s487, 1024
        $region44: #{patch_merging_forward.1} parent=39 // pred_fallthru
          _
      $region40: #{patch_merging_forward.1} parent=5 // pred_fallthru
        _
    $region6: #{patch_merging_forward.1} parent=1 // loop_footer
      %s16 = sadd.s32 1, %s12
    $region7: #{patch_merging_forward.1} parent=1 // loop_footer_branch
      %11 = sbr.rel target = $region3
    $region8: #{patch_merging_forward.1} parent=1 // loop_exit
      _
    %492 = vsyncpa [#allocation3], 1
    %s493 = scalar_lea.sflag [#allocation3], 1
    %494 = vsyncpa %s493, 1

</llo_original>
